<compile_context>
chip_gen: v7x
topology: tpu7x:2x2x1
jax: 0.10.0
libtpu: 0.0.40
codegen_flags: <defaults>
</compile_context>

<pallas_src>
from functools import partial

import numpy as np
import jax
import jax.numpy as jnp
from jax import lax
from jax.experimental import pallas as pl
from jax.experimental.pallas import tpu as pltpu


# ----------------------------------------------------------------------------
# Host-side persistent homology pairing (sequential union-find; no Pallas
# equivalent — identical semantics to the PyTorch reference).
# ----------------------------------------------------------------------------
class UnionFind:
    def __init__(self, n_vertices):
        self._parent = np.arange(n_vertices, dtype=int)

    def find(self, u):
        if self._parent[u] == u:
            return u
        self._parent[u] = self.find(self._parent[u])
        return self._parent[u]

    def merge(self, u, v):
        if u != v:
            self._parent[self.find(u)] = self.find(v)


def persistence_pairs(matrix: np.ndarray):
    n_vertices = matrix.shape[0]
    uf = UnionFind(n_vertices)
    triu_indices = np.triu_indices_from(matrix)
    edge_weights = matrix[triu_indices]
    edge_indices = np.argsort(edge_weights, kind="stable")
    pairs = []
    for edge_index in edge_indices:
        u = triu_indices[0][edge_index]
        v = triu_indices[1][edge_index]
        younger = uf.find(u)
        older = uf.find(v)
        if younger == older:
            continue
        elif younger > older:
            uf.merge(v, u)
        else:
            uf.merge(u, v)
        pairs.append((min(u, v), max(u, v)))
    return np.array(pairs), np.array([])


# ----------------------------------------------------------------------------
# Pallas kernel: index-driven gather + fused squared-difference reduction.
#   idx_ref   : SMEM int32 (4, PAD)   rows = [r1, c1, r2, c2] (zero padded)
#   npairs_ref: SMEM int32 (1,)       number of valid pairs P
#   scale_ref : SMEM f32   (1,)       1 / n_vertices
#   d1_ref/d2_ref : VMEM f32 (PAD, PAD) zero-padded distance matrices
#   o_ref     : SMEM f32 (1, 1)       scalar loss
# ----------------------------------------------------------------------------
def _topoae_kernel(idx_ref, npairs_ref, scale_ref, d1_ref, d2_ref, o_ref, acc_ref):
    pad = d1_ref.shape[1]
    acc_ref[...] = jnp.zeros_like(acc_ref)
    lane_iota = lax.broadcasted_iota(jnp.int32, (1, pad), 1)   # hoisted, built once
    n_pairs = npairs_ref[0]

    @pl.loop(0, n_pairs)                                       # dynamic trip count
    def _(k):
        r1 = idx_ref[0, k]
        c1 = idx_ref[1, k]
        r2 = idx_ref[2, k]
        c2 = idx_ref[3, k]
        row1 = d1_ref[pl.ds(r1, 1), :]                         # (1, PAD) dynamic row load
        row2 = d2_ref[pl.ds(r2, 1), :]                         # (1, PAD)
        v1 = jnp.sum(jnp.where(lane_iota == c1, row1, 0.0), axis=-1, keepdims=True)
        v2 = jnp.sum(jnp.where(lane_iota == c2, row2, 0.0), axis=-1, keepdims=True)
        diff = v1 - v2                                         # fused: single diff path
        acc_ref[...] += diff * diff

    total = acc_ref[...] * scale_ref[0]                        # (1, 1)
    o_ref[0, 0] = total[0, 0]


@partial(jax.jit, static_argnames=("pad",))
def _topoae_device(d1, d2, idx, n_pairs, scale, *, pad):
    n = d1.shape[0]
    d1p = jnp.zeros((pad, pad), jnp.float32).at[:n, :n].set(d1.astype(jnp.float32))
    d2p = jnp.zeros((pad, pad), jnp.float32).at[:n, :n].set(d2.astype(jnp.float32))
    out = pl.pallas_call(
        _topoae_kernel,
        out_shape=jax.ShapeDtypeStruct((1, 1), jnp.float32),
        in_specs=[
            pl.BlockSpec(memory_space=pltpu.MemorySpace.SMEM),   # idx
            pl.BlockSpec(memory_space=pltpu.MemorySpace.SMEM),   # n_pairs
            pl.BlockSpec(memory_space=pltpu.MemorySpace.SMEM),   # scale = 1/N
            pl.BlockSpec(memory_space=pltpu.MemorySpace.VMEM),   # D1
            pl.BlockSpec(memory_space=pltpu.MemorySpace.VMEM),   # D2
        ],
        out_specs=pl.BlockSpec(memory_space=pltpu.MemorySpace.SMEM),
        scratch_shapes=[pltpu.VMEM((1, 1), jnp.float32)],
    )(idx, n_pairs, scale, d1p, d2p)
    return out[0, 0]


# ----------------------------------------------------------------------------
# Wrapper reproducing TopoAELoss.forward (match_edges=None).
# ----------------------------------------------------------------------------
_MIN_PAD = 128  # (sublane, lane)-aligned single block


def topoae_loss(input_distances: jnp.ndarray, latent_distances: jnp.ndarray):
    """Returns (loss, distance_components) like TopoAELoss(match_edges=None)."""
    n = int(input_distances.shape[0])

    # One device->host copy per matrix, native dtype (matches .cpu().numpy()).
    d1_np = np.asarray(jax.device_get(input_distances))
    d2_np = np.asarray(jax.device_get(latent_distances))

    pairs1, _ = persistence_pairs(d1_np)
    pairs2, _ = persistence_pairs(d2_np)
    to_set = lambda arr: set(tuple(e) for e in arr)
    matched = float(len(to_set(pairs1).intersection(to_set(pairs2))))

    p1 = np.asarray(pairs1).reshape(-1, 2).astype(np.int32)  # guards n < 2 (empty)
    p2 = np.asarray(pairs2).reshape(-1, 2).astype(np.int32)
    if p1.shape[0] != p2.shape[0]:
        raise ValueError(
            "TopoAE (match_edges=None) requires equally many persistence pairs "
            f"for both spaces, got {p1.shape[0]} vs {p2.shape[0]}")
    n_pairs = p1.shape[0]

    pad = max(_MIN_PAD, -(-n // _MIN_PAD) * _MIN_PAD)

    # Tiny SMEM-bound operands instead of 4 x PAD^2 one-hot selector matrices.
    idx = np.zeros((4, pad), np.int32)
    idx[0, :n_pairs] = p1[:, 0]
    idx[1, :n_pairs] = p1[:, 1]
    idx[2, :n_pairs] = p2[:, 0]
    idx[3, :n_pairs] = p2[:, 1]
    meta = np.array([n_pairs], np.int32)
    scale = np.array([1.0 / n], np.float32)

    loss = _topoae_device(input_distances, latent_distances, idx, meta, scale, pad=pad)
    # TODO(synk): match_edges='symmetric'/'random' variants not implemented
    # (same kernel, different (pairs, matrix) combinations).
    # TODO(synk): for very large N, add a grid over pair blocks marked
    # "parallel" to use both v7x TensorCores; pure overhead at these sizes.
    return loss, {"matched_pairs": matched}


# ----------------------------------------------------------------------------
if __name__ == "__main__":
    key = jax.random.PRNGKey(0)
    k1, k2 = jax.random.split(key)

    N, D_IN, D_LAT = 16, 8, 2
    x = jax.random.normal(k1, (N, D_IN), jnp.float32)            # "input" points
    w = jax.random.normal(k2, (D_IN, D_LAT), jnp.float32) * 0.5   # deterministic proj
    z = x @ w                                                     # "latent" points

    def pdist(a):
        sq = jnp.sum((a[:, None, :] - a[None, :, :]) ** 2, axis=-1)
        return jnp.sqrt(jnp.maximum(sq, 0.0))

    input_distances = pdist(x)    # (N, N)
    latent_distances = pdist(z)   # (N, N)

    loss, comps = topoae_loss(input_distances, latent_distances)
    loss = jax.block_until_ready(loss)

    # Pure-numpy reference of the forward pass (match_edges=None).
    d1_np = np.asarray(jax.device_get(input_distances))
    d2_np = np.asarray(jax.device_get(latent_distances))
    p1, _ = persistence_pairs(d1_np)
    p2, _ = persistence_pairs(d2_np)
    sig1 = d1_np[p1[:, 0], p1[:, 1]]
    sig2 = d2_np[p2[:, 0], p2[:, 1]]
    ref = float(((sig1 - sig2) ** 2).sum() / N)

    assert np.isfinite(float(loss))
    np.testing.assert_allclose(float(loss), ref, rtol=1e-4, atol=1e-6)
    print("KERNEL_OK")
</pallas_src>

<mosaic_0001>
module attributes {stable_mosaic.version = 11 : i64} {
  func.func @_topoae_kernel(%arg0: memref<4x128xi32, #tpu.memory_space<smem>>, %arg1: memref<1xi32, #tpu.memory_space<smem>>, %arg2: memref<1xf32, #tpu.memory_space<smem>>, %arg3: memref<128x128xf32, #tpu.memory_space<vmem>>, %arg4: memref<128x128xf32, #tpu.memory_space<vmem>>, %arg5: memref<1x1xf32, #tpu.memory_space<smem>>, %arg6: memref<1x1xf32, #tpu.memory_space<vmem>>) attributes {dimension_semantics = [], scalar_prefetch = 0 : i64, scratch_operands = 1 : i64, tpu.core_type = #tpu.core_type<tc>} {
    %cst = arith.constant 0.000000e+00 : f32
    %0 = vector.broadcast %cst : f32 to vector<1x1xf32>
    %c0 = arith.constant 0 : index
    %c0_0 = arith.constant 0 : index
    %1 = vector.load %arg6[%c0, %c0_0] : memref<1x1xf32, #tpu.memory_space<vmem>>, vector<1x1xf32>
    tpu.vector_store %arg6[%c0, %c0_0], %0 {strides = array<i32>} : memref<1x1xf32, #tpu.memory_space<vmem>>, vector<1x1xf32>,
    %2 = tpu.iota {dimensions = array<i32: 1>} : vector<1x128xi32>
    %c0_1 = arith.constant 0 : index
    %3 = memref.load %arg1[%c0_1] : memref<1xi32, #tpu.memory_space<smem>>
    %c0_i32 = arith.constant 0 : i32
    %4 = arith.subi %3, %c0_i32 : i32
    %c1_i32 = arith.constant 1 : i32
    %c1_i32_2 = arith.constant 1 : i32
    %5 = arith.subi %c1_i32, %c1_i32_2 : i32
    %6 = arith.addi %4, %5 : i32
    %c1_i32_3 = arith.constant 1 : i32
    %7 = arith.divsi %6, %c1_i32_3 : i32
    %c1_i32_4 = arith.constant 1 : i32
    %c0_i32_5 = arith.constant 0 : i32
    %c0_i32_6 = arith.constant 0 : i32
    %8 = arith.subi %7, %c0_i32_6 : i32
    %9 = arith.addi %c0_i32_6, %8 : i32
    %c1_i32_7 = arith.constant 1 : i32
    scf.for %arg7 = %c0_i32_6 to %9 step %c1_i32_7  : i32 {
      %16 = arith.muli %arg7, %c1_i32_4 : i32
      %17 = arith.addi %c0_i32_5, %16 : i32
      %c0_13 = arith.constant 0 : index
      %18 = arith.index_cast %17 : i32 to index
      %19 = memref.load %arg0[%c0_13, %18] : memref<4x128xi32, #tpu.memory_space<smem>>
      %c1 = arith.constant 1 : index
      %20 = arith.index_cast %17 : i32 to index
      %21 = memref.load %arg0[%c1, %20] : memref<4x128xi32, #tpu.memory_space<smem>>
      %c2 = arith.constant 2 : index
      %22 = arith.index_cast %17 : i32 to index
      %23 = memref.load %arg0[%c2, %22] : memref<4x128xi32, #tpu.memory_space<smem>>
      %c3 = arith.constant 3 : index
      %24 = arith.index_cast %17 : i32 to index
      %25 = memref.load %arg0[%c3, %24] : memref<4x128xi32, #tpu.memory_space<smem>>
      %26 = arith.index_cast %19 : i32 to index
      %c0_14 = arith.constant 0 : index
      %27 = vector.load %arg3[%26, %c0_14] : memref<128x128xf32, #tpu.memory_space<vmem>>, vector<1x128xf32>
      %28 = arith.index_cast %23 : i32 to index
      %c0_15 = arith.constant 0 : index
      %29 = vector.load %arg4[%28, %c0_15] : memref<128x128xf32, #tpu.memory_space<vmem>>, vector<1x128xf32>
      %30 = vector.broadcast %21 : i32 to vector<1x128xi32>
      %31 = arith.cmpi eq, %2, %30 : vector<1x128xi32>
      %cst_16 = arith.constant 0.000000e+00 : f32
      %32 = vector.broadcast %cst_16 : f32 to vector<1x128xf32>
      %33 = arith.select %31, %27, %32 : vector<1x128xi1>, vector<1x128xf32>
      %cst_17 = arith.constant dense<0.000000e+00> : vector<1xf32>
      %34 = vector.multi_reduction <add>, %33, %cst_17 [1] : vector<1x128xf32> to vector<1xf32>
      %35 = vector.shape_cast %34 : vector<1xf32> to vector<1x1xf32>
      %36 = vector.broadcast %25 : i32 to vector<1x128xi32>
      %37 = arith.cmpi eq, %2, %36 : vector<1x128xi32>
      %cst_18 = arith.constant 0.000000e+00 : f32
      %38 = vector.broadcast %cst_18 : f32 to vector<1x128xf32>
      %39 = arith.select %37, %29, %38 : vector<1x128xi1>, vector<1x128xf32>
      %cst_19 = arith.constant dense<0.000000e+00> : vector<1xf32>
      %40 = vector.multi_reduction <add>, %39, %cst_19 [1] : vector<1x128xf32> to vector<1xf32>
      %41 = vector.shape_cast %40 : vector<1xf32> to vector<1x1xf32>
      %42 = arith.subf %35, %41 : vector<1x1xf32>
      %c0_20 = arith.constant 0 : index
      %c0_21 = arith.constant 0 : index
      %43 = vector.load %arg6[%c0_20, %c0_21] : memref<1x1xf32, #tpu.memory_space<vmem>>, vector<1x1xf32>
      %44 = arith.mulf %42, %42 : vector<1x1xf32>
      %45 = arith.addf %43, %44 : vector<1x1xf32>
      %c0_22 = arith.constant 0 : index
      %c0_23 = arith.constant 0 : index
      %46 = vector.load %arg6[%c0_22, %c0_23] : memref<1x1xf32, #tpu.memory_space<vmem>>, vector<1x1xf32>
      tpu.vector_store %arg6[%c0_22, %c0_23], %45 {strides = array<i32>} : memref<1x1xf32, #tpu.memory_space<vmem>>, vector<1x1xf32>,
    }
    %c0_8 = arith.constant 0 : index
    %c0_9 = arith.constant 0 : index
    %10 = vector.load %arg6[%c0_8, %c0_9] : memref<1x1xf32, #tpu.memory_space<vmem>>, vector<1x1xf32>
    %c0_10 = arith.constant 0 : index
    %11 = memref.load %arg2[%c0_10] : memref<1xf32, #tpu.memory_space<smem>>
    %12 = vector.broadcast %11 : f32 to vector<1x1xf32>
    %13 = arith.mulf %10, %12 : vector<1x1xf32>
    %14 = vector.extract %13[0, 0] : f32 from vector<1x1xf32>
    %c0_11 = arith.constant 0 : index
    %c0_12 = arith.constant 0 : index
    %15 = memref.load %arg5[%c0_11, %c0_12] : memref<1x1xf32, #tpu.memory_space<smem>>
    memref.store %14, %arg5[%c0_11, %c0_12] : memref<1x1xf32, #tpu.memory_space<smem>>
    return
  }
}

</mosaic_0001>

<llo_original>
// kernel: _topoae_device.1
$region0: #{_topoae_device.1}
  #allocation0 [shape = 'u32[]', space=smem, size = 0x4, offset = 0x4, fixed_abs, tag = 'smem constant byte address 0x4 - core index']
  #allocation1 [shape = 'u32[144,128]{1,0:T(1,128)}', space=vmem, size = 0x12000, scoped, tag = 'internal scratch']
  #allocation2 [shape = 'f32[1,1]{1,0:T(1,128)}', space=vmem, size = 0x200, scoped, tag = 'scratch operand']
  #allocation3 [shape = 's32[1]{0:T(128)S(6)}', space=smem, size = 0x200, scoped, tag = 'scoped memory for _topoae_device.1']
  #allocation4 [shape = 'f32[1]{0:T(128)S(6)}', space=smem, size = 0x200, scoped, tag = 'scoped memory for _topoae_device.1']
  %s0 = inlined_call_operand.vmem [shape: s32[4,128], index: 0, kind: input, shape index: {}]
  %s1 = inlined_call_operand.<no memory space> [shape: s32[1], index: 1, kind: input, shape index: {}]
  %s2 = inlined_call_operand.<no memory space> [shape: f32[1], index: 2, kind: input, shape index: {}]
  %s3 = inlined_call_operand.vmem [shape: f32[128,128], index: 3, kind: input, shape index: {}]
  %s4 = inlined_call_operand.vmem [shape: f32[128,128], index: 4, kind: input, shape index: {}]
  %s5 = inlined_call_operand.hbm [shape: f32[1,1], index: 5, kind: output, shape index: {}]
  %s6 = sld [smem:[#allocation0]]
  $region41: #{_topoae_device.1} parent=0
    _
  %s8 = ssub.s32 1, %s6
  %s9 = scalar_select 0, %s8, %s6
  %10 = sst [smem:[#allocation3]] %s1
  %11 = sst [smem:[#allocation4]] %s2
  $region1: #{_topoae_device.1} parent=0
    #allocation5 [shape = 'u8[2048]{0}', space=smem, size = 0x800, scoped, tag = 'input window, operand 0, single buffered']
    #allocation6 [shape = 's32[1]{0}', space=sflag, size = 0x4, scoped, tag = 'scoped memory for _topoae_device.1']
    #allocation7 [shape = 's32[1]{0}', space=sflag, size = 0x4, scoped, tag = 'scoped memory for _topoae_device.1']
    #allocation8 [shape = 'u8[512]{0}', space=smem, size = 0x200, scoped, tag = 'output window, operand 0, single buffered']
    %12 = vsyncpa [#allocation7], 0
    %13 = vsyncpa [#allocation6], 0
    // Predicated region
    $region2: #{_topoae_device.1} parent=1 // pred_check
      _
    $region3: #{_topoae_device.1} parent=1 // pred_check_branch
      %15 = sbr.rel (0) target = $region5
    $region4: #{_topoae_device.1} parent=1 // pred_region
      %s17 = ssub.s32 64, 64
      %18 = vsyncadd [#allocation7], %s17
      %s20 = sshll.u32 %s0, 4
      %s21 = int_to_ptr.vmem [resolvable:$true] %s20
      %23 = dma.vmem_to_smem %s21, 64, [#allocation5], [#allocation7]
    $region5: #{_topoae_device.1} parent=1 // pred_fallthru
      _
    // Predicated region
    $region6: #{_topoae_device.1} parent=1 // pred_check
      _
    $region7: #{_topoae_device.1} parent=1 // pred_check_branch
      %25 = sbr.rel (0) target = $region9
    $region8: #{_topoae_device.1} parent=1 // pred_region
      _
    $region9: #{_topoae_device.1} parent=1 // pred_fallthru
      _
    // Predicated region
    $region10: #{_topoae_device.1} parent=1 // pred_check
      _
    $region11: #{_topoae_device.1} parent=1 // pred_check_branch
      %27 = sbr.rel (0) target = $region13
    $region12: #{_topoae_device.1} parent=1 // pred_region
      _
    $region13: #{_topoae_device.1} parent=1 // pred_fallthru
      _
    // Predicated region
    $region14: #{_topoae_device.1} parent=1 // pred_check
      _
    $region15: #{_topoae_device.1} parent=1 // pred_check_branch
      %29 = sbr.rel (0) target = $region17
    $region16: #{_topoae_device.1} parent=1 // pred_region
      _
    $region17: #{_topoae_device.1} parent=1 // pred_fallthru
      _
    // Predicated region
    $region18: #{_topoae_device.1} parent=1 // pred_check
      _
    $region19: #{_topoae_device.1} parent=1 // pred_check_branch
      %31 = sbr.rel (0) target = $region21
    $region20: #{_topoae_device.1} parent=1 // pred_region
      _
    $region21: #{_topoae_device.1} parent=1 // pred_fallthru
      _
    // Predicated region
    $region22: #{_topoae_device.1} parent=1 // pred_check
      _
    $region23: #{_topoae_device.1} parent=1 // pred_check_branch
      %33 = sbr.rel (0) target = $region25
    $region24: #{_topoae_device.1} parent=1 // pred_region
      %34 = dma.done [#allocation7], 64
    $region25: #{_topoae_device.1} parent=1 // pred_fallthru
      _
    %35 = sfence
    %vm36 = vcmask 0
    %37 = vst.msk [vmem:[#allocation2] sm:$0x1] %vm36, 0.0
    %v38 = vlaneseq
    %v39 = vand.u32 %v38, 127
    %s40 = sld [smem:[#allocation3]]
    // While loop
    $region26: #{_topoae_device.1} parent=1 // loop_pre_header
      _
    $region27: #{_topoae_device.1} parent=1 // loop_header
      %s42 = sphi 0, %s44
      %p43 = scmp.ge.s32.totalorder %s42, %s40
    $region28: #{_topoae_device.1} parent=1 // loop_header_branch
      %46 = sbr.rel (%p43) target = $region32
    $region29: #{_topoae_device.1} parent=1 // loop_body
      %s47 = sld [smem:[#allocation5 + %s42]]
      %s48 = sshra.s32 %s42, 7
      %s49 = sand.u32 %s42, 127
      %s50 = sadd.s32 %s48, 1
      %s51 = smul.u32 %s50, 128
      %s52 = sshra.s32 %s42, 7
      %s53 = sand.u32 %s42, 127
      %s54 = sadd.s32 %s51, %s53
      %s55 = sld [smem:[#allocation5 + %s54]]
      %s56 = sadd.s32 %s48, 2
      %s57 = smul.u32 %s56, 128
      %s58 = sadd.s32 %s57, %s53
      %s59 = sld [smem:[#allocation5 + %s58]]
      %s60 = sadd.s32 %s48, 3
      %s61 = smul.u32 %s60, 128
      %s62 = sadd.s32 %s61, %s53
      %s63 = sld [smem:[#allocation5 + %s62]]
      %s64 = scalar_lea.vmem %s3, %s47
      %v65 = vld [vmem:[%s64] sm:$0x1]
      %s66 = scalar_lea.vmem %s4, %s59
      %v67 = vld [vmem:[%s66] sm:$0x1]
      %v68 = vstv %s55
      %vm69 = vcmp.eq.s32.totalorder %v39, %v68
      %v70 = vsel %vm69, %v65, 0.0
      %vm71 = vcmask 1040384
      %v72 = vsel %vm71, %v70, 0.0
      %73 = vadd.xlane.f32.xlu0 %v72
      %v74 = vpop.xlane.xlu0 %73
      %v75 = vstv %s63
      %vm76 = vcmp.eq.s32.totalorder %v39, %v75
      %v77 = vsel %vm76, %v67, 0.0
      %v78 = vsel %vm71, %v77, 0.0
      %79 = vadd.xlane.f32.xlu0 %v78
      %v80 = vpop.xlane.xlu0 %79
      %v81 = vsub.f32 %v74, %v80
      %v82 = vld [vmem:[#allocation2] sm:$0x1]
      %v83 = vmul.f32 %v81, %v81
      %v84 = vadd.f32 %v82, %v83
      %85 = vst.msk [vmem:[#allocation2] sm:$0x1] %vm36, %v84
    $region30: #{_topoae_device.1} parent=1 // loop_footer
      %s44 = sadd.s32 %s42, 1
    $region31: #{_topoae_device.1} parent=1 // loop_footer_branch
      %41 = sbr.rel target = $region27
    $region32: #{_topoae_device.1} parent=1 // loop_exit
      _
    %v86 = vld [vmem:[#allocation2] sm:$0x1]
    %s87 = sld [smem:[#allocation4]]
    %v88 = vstv %s87
    %v89 = vmul.f32 %v86, %v88
    %s90 = vtos %v89
    %s91 = scalar_lea.smem [#allocation8], 0
    %92 = sst [smem:[%s91]] %s90
    // Predicated region
    $region33: #{_topoae_device.1} parent=1 // pred_check
      _
    $region34: #{_topoae_device.1} parent=1 // pred_check_branch
      %94 = sbr.rel (0) target = $region36
    $region35: #{_topoae_device.1} parent=1 // pred_region
      %s96 = ssub.s32 16, 16
      %97 = vsyncadd [#allocation6], %s96
      %100 = dma.smem_to_hbm [#allocation8], 16, %s5, [#allocation6]
    $region36: #{_topoae_device.1} parent=1 // pred_fallthru
      _
    // Predicated region
    $region37: #{_topoae_device.1} parent=1 // pred_check
      _
    $region38: #{_topoae_device.1} parent=1 // pred_check_branch
      %102 = sbr.rel (0) target = $region40
    $region39: #{_topoae_device.1} parent=1 // pred_region
      %103 = dma.done [#allocation6], 16
    $region40: #{_topoae_device.1} parent=1 // pred_fallthru
      _
    %104 = sfence
    %105 = vsyncpa [#allocation6], 1
    %106 = vsyncpa [#allocation7], 1

</llo_original>
